<compile_context>
chip_gen: v7x
topology: tpu7x:2x2x1
jax: 0.10.0
libtpu: 0.0.40
codegen_flags: <defaults>
</compile_context>

<pallas_src>
import functools

import jax
import jax.numpy as jnp
from jax.experimental import pallas as pl
from jax.experimental.pallas import tpu as pltpu

BN_EPS = 1e-5
LEAKY_SLOPE = 0.01          # nn.LeakyReLU() default negative_slope
_LANE_DENSE_MAX_OUT = 8     # use VPU-reduce / lane-dense output path for out_dim <= 8


# ---------------------------------------------------------------------------
# Kernels
# ---------------------------------------------------------------------------
def _mlp_surv_kernel_lane(x_ref, w1_ref, aux_ref, b2_ref, out_ref, *, out_dim):
    """Lane-dense path for small out_dim (module default out_dim == 1).

    x_ref:   (block_b, in_size)            input rows
    w1_ref:  (in_size, fil_num)            BN1/BN2-folded fc1 weight
    aux_ref: (1 + out_dim, fil_num)        row 0      = folded fc1 bias
                                           rows 1..   = w2.T rows (one per output)
    b2_ref:  (out_dim, 1)                  fc2 bias (added once, post-reduction)
    out_ref: (out_dim, block_b)            lane-dense sigmoid output
    """
    x = x_ref[...]

    # fused (BN1 -> do1 -> fc1 -> BN2): one MXU matmul + bias
    h = jnp.dot(x, w1_ref[...], preferred_element_type=jnp.float32) + aux_ref[0:1, :]

    # ac1: LeakyReLU (single VPU max)
    h = jnp.maximum(h, LEAKY_SLOPE * h)

    # do2: identity (inference)

    # fc2 per output column: VPU multiply + lane (XLU) reduction -> (1, block_b).
    # Avoids an N<128 MXU matmul and keeps the writeback lane-dense.
    # NOTE: the (block_b,) -> (1, block_b) relayout rides the XLU, which has
    # slack here; revisit only if a bundle dump shows it binding at huge tiles.
    rows = []
    for j in range(out_dim):  # static, tiny loop (out_dim <= 8)
        r = jnp.sum(h * aux_ref[1 + j:2 + j, :], axis=-1)   # (block_b,)
        rows.append(r.reshape(1, -1))                       # (1, block_b)
    o = rows[0] if out_dim == 1 else jnp.concatenate(rows, axis=0)  # (out_dim, block_b)

    # fc2 bias once, after the reduction
    o = o + b2_ref[...]

    # sigmoid as tanh: one EUP push per element, exact
    out_ref[...] = (0.5 * (jnp.tanh(0.5 * o) + 1.0)).astype(out_ref.dtype)


def _mlp_surv_kernel_gen(x_ref, w1_ref, b1_ref, w2_ref, b2_ref, out_ref):
    """General out_dim > 8 fallback: keep fc2 on the MXU, (block_b, out_dim) output."""
    x = x_ref[...]
    h = jnp.dot(x, w1_ref[...], preferred_element_type=jnp.float32) + b1_ref[...]
    h = jnp.maximum(h, LEAKY_SLOPE * h)
    o = jnp.dot(h, w2_ref[...], preferred_element_type=jnp.float32) + b2_ref[...]
    out_ref[...] = (0.5 * (jnp.tanh(0.5 * o) + 1.0)).astype(out_ref.dtype)


# ---------------------------------------------------------------------------
# Host-side BN folding (one-time cost; parameters are static in eval mode)
# ---------------------------------------------------------------------------
def fold_params(params, eps=BN_EPS):
    """Fold eval-mode BN1/BN2 into fc1:  BN2(fc1(BN1(x))) == x @ w1f + b1f."""
    s1 = params["g1"] * jax.lax.rsqrt(params["v1"] + eps)      # (1, in_size)
    t1 = params["b1"] - params["m1"] * s1                      # (1, in_size)
    s2 = params["g2"] * jax.lax.rsqrt(params["v2"] + eps)      # (1, fil_num)
    t2 = params["b2"] - params["m2"] * s2                      # (1, fil_num)

    w1f = (s1.reshape(-1, 1) * params["w1"]) * s2.reshape(1, -1)   # (in, fil)
    b1f = (t1 @ params["w1"] + params["bfc1"]) * s2 + t2           # (1, fil)
    return {"w1f": w1f, "b1f": b1f, "w2": params["w2"], "bfc2": params["bfc2"]}


# ---------------------------------------------------------------------------
# Wrapper
# ---------------------------------------------------------------------------
def _round_up(n, m):
    return ((n + m - 1) // m) * m


def mlp_surv_forward(x, folded, *, block_b=4096):
    """x: (B, in_size) float32. folded: output of fold_params(). Returns (B, out_dim)."""
    B, in_size = x.shape
    fil_num = folded["w1f"].shape[1]
    out_dim = folded["w2"].shape[1]
    lane_dense = out_dim <= _LANE_DENSE_MAX_OUT

    if lane_dense:
        # One (1+out_dim, fil_num) aux slab: row 0 = folded bias, rows 1.. = w2.T.
        aux = jnp.concatenate([folded["b1f"], folded["w2"].T], axis=0)
        b2c = folded["bfc2"].reshape(out_dim, 1)
        args = (x, folded["w1f"], aux, b2c)
        kernel = functools.partial(_mlp_surv_kernel_lane, out_dim=out_dim)
        out_full_shape = (out_dim, B)
    else:
        args = (x, folded["w1f"], folded["b1f"], folded["w2"], folded["bfc2"])
        kernel = _mlp_surv_kernel_gen
        out_full_shape = (B, out_dim)

    if B <= block_b:
        # Small batch: whole-array VMEM refs, no grid (no 1-step pipeline overhead).
        vmem = pltpu.MemorySpace.VMEM
        out = pl.pallas_call(
            kernel,
            out_shape=jax.ShapeDtypeStruct(out_full_shape, jnp.float32),
            in_specs=[pl.BlockSpec(memory_space=vmem) for _ in args],
            out_specs=pl.BlockSpec(memory_space=vmem),
        )(*args)
    else:
        # Large batch: batch-tiled grid.  Tile is big (>= ~1 MiB of x per step)
        # but capped so the grid keeps >= ~4 steps (v7x: both TCs stay pipelined).
        four_way = 128 * pl.cdiv(B, 4 * 128)           # ~ceil(B/4), rounded to 128
        eff_bb = min(block_b, four_way)
        eff_bb = max(128, (eff_bb // 128) * 128)       # multiple of 128
        grid = (pl.cdiv(B, eff_bb),)                   # ragged last block handled by Pallas

        if lane_dense:
            in_specs = [
                pl.BlockSpec((eff_bb, in_size), lambda i: (i, 0)),
                pl.BlockSpec((in_size, fil_num), lambda i: (0, 0)),
                pl.BlockSpec((1 + out_dim, fil_num), lambda i: (0, 0)),
                pl.BlockSpec((out_dim, 1), lambda i: (0, 0)),
            ]
            out_specs = pl.BlockSpec((out_dim, eff_bb), lambda i: (0, i))
        else:
            in_specs = [
                pl.BlockSpec((eff_bb, in_size), lambda i: (i, 0)),
                pl.BlockSpec((in_size, fil_num), lambda i: (0, 0)),
                pl.BlockSpec((1, fil_num), lambda i: (0, 0)),
                pl.BlockSpec((fil_num, out_dim), lambda i: (0, 0)),
                pl.BlockSpec((1, out_dim), lambda i: (0, 0)),
            ]
            out_specs = pl.BlockSpec((eff_bb, out_dim), lambda i: (i, 0))

        # VMEM budget: x tile lane-padded to 128 lanes, double-buffered, plus the
        # (small) revisited weight blocks and output tile.  Raise the scoped limit
        # only if we'd exceed the most conservative default (v5e: 16 MiB), and
        # stay under v7x's 64 MiB/TC physical VMEM.
        lane_pad = lambda n: _round_up(n, 128)
        sub_pad = lambda n: _round_up(n, 8)
        x_tile_b = eff_bb * lane_pad(in_size) * 4
        if lane_dense:
            out_tile_b = sub_pad(out_dim) * lane_pad(eff_bb) * 4
        else:
            out_tile_b = eff_bb * lane_pad(out_dim) * 4
        weights_b = 4 * (
            sub_pad(in_size) * lane_pad(fil_num)
            + sub_pad(1 + out_dim) * lane_pad(fil_num)
            + sub_pad(fil_num) * lane_pad(max(out_dim, 1))
            + 8 * 128
        )
        est = 2 * (x_tile_b + out_tile_b) + 2 * weights_b + (1 << 20)
        vmem_limit = None
        if est > 12 * 1024 * 1024:
            vmem_limit = min(int(est * 3 // 2), 60 * 1024 * 1024)

        out = pl.pallas_call(
            kernel,
            out_shape=jax.ShapeDtypeStruct(out_full_shape, jnp.float32),
            grid=grid,
            in_specs=in_specs,
            out_specs=out_specs,
            compiler_params=pltpu.CompilerParams(
                dimension_semantics=("parallel",),
                vmem_limit_bytes=vmem_limit,
            ),
        )(*args)

    if lane_dense:
        out = out.T  # lane-dense (out_dim, B) -> module's (B, out_dim); layout plumbing only
    return out


# ---------------------------------------------------------------------------
# Synthetic parameters + pure-JAX reference
# ---------------------------------------------------------------------------
def init_params(key, in_size, fil_num, output_shape=1):
    ks = jax.random.split(key, 8)
    f32 = jnp.float32
    return {
        # bn1
        "g1": jnp.ones((1, in_size), f32),
        "b1": jnp.zeros((1, in_size), f32),
        "m1": 0.1 * jax.random.normal(ks[0], (1, in_size), f32),
        "v1": 1.0 + 0.1 * jax.random.uniform(ks[1], (1, in_size), f32),
        # fc1 (stored transposed vs torch: (in_size, fil_num) for x @ W)
        "w1": jax.random.normal(ks[2], (in_size, fil_num), f32) / jnp.sqrt(f32(in_size)),
        "bfc1": 0.01 * jax.random.normal(ks[3], (1, fil_num), f32),
        # bn2
        "g2": jnp.ones((1, fil_num), f32),
        "b2": jnp.zeros((1, fil_num), f32),
        "m2": 0.1 * jax.random.normal(ks[4], (1, fil_num), f32),
        "v2": 1.0 + 0.1 * jax.random.uniform(ks[5], (1, fil_num), f32),
        # fc2
        "w2": jax.random.normal(ks[6], (fil_num, output_shape), f32) / jnp.sqrt(f32(fil_num)),
        "bfc2": 0.01 * jax.random.normal(ks[7], (1, output_shape), f32),
    }


def _reference_forward(x, p):
    """Unfused pure-JAX reference (exact PyTorch eval-mode semantics)."""
    x = (x - p["m1"]) * jax.lax.rsqrt(p["v1"] + BN_EPS) * p["g1"] + p["b1"]
    h = x @ p["w1"] + p["bfc1"]
    h = (h - p["m2"]) * jax.lax.rsqrt(p["v2"] + BN_EPS) * p["g2"] + p["b2"]
    h = jnp.where(h > 0, h, LEAKY_SLOPE * h)
    o = h @ p["w2"] + p["bfc2"]
    return jax.nn.sigmoid(o)


if __name__ == "__main__":
    key = jax.random.PRNGKey(0)
    k_x, k_p, k_x2, k_p2, k_x3, k_p3 = jax.random.split(key, 6)

    IN_SIZE, FIL_NUM = 32, 16

    # --- Case 1: small batch, output_shape=1 (module default): no-grid VMEM path ---
    B = 8
    x = jax.random.normal(k_x, (B, IN_SIZE), jnp.float32)
    params = init_params(k_p, IN_SIZE, FIL_NUM, output_shape=1)
    folded = fold_params(params)
    out = jax.block_until_ready(mlp_surv_forward(x, folded))
    ref = _reference_forward(x, params)
    assert out.shape == (B, 1)
    assert jnp.allclose(out, ref, atol=2e-3, rtol=2e-3), "mismatch vs reference (small batch)"

    # --- Case 2: batch > tile, non-divisible (ragged cdiv grid), output_shape=1 ---
    B2 = 600
    x2 = jax.random.normal(k_x2, (B2, IN_SIZE), jnp.float32)
    out2 = jax.block_until_ready(mlp_surv_forward(x2, folded, block_b=256))
    ref2 = _reference_forward(x2, params)
    assert out2.shape == (B2, 1)
    assert jnp.allclose(out2, ref2, atol=2e-3, rtol=2e-3), "mismatch vs reference (ragged grid)"

    # --- Case 3: output_shape > 1 (lane-dense multi-output), small batch ---
    params4 = init_params(k_p2, IN_SIZE, FIL_NUM, output_shape=4)
    folded4 = fold_params(params4)
    out4 = jax.block_until_ready(mlp_surv_forward(x, folded4))
    ref4 = _reference_forward(x, params4)
    assert out4.shape == (B, 4)
    assert jnp.allclose(out4, ref4, atol=2e-3, rtol=2e-3), "mismatch vs reference (out_dim=4)"

    # --- Case 4: output_shape > 1 + ragged grid path ---
    B3 = 300
    x3 = jax.random.normal(k_x3, (B3, IN_SIZE), jnp.float32)
    params3 = init_params(k_p3, IN_SIZE, FIL_NUM, output_shape=3)
    folded3 = fold_params(params3)
    out3 = jax.block_until_ready(mlp_surv_forward(x3, folded3, block_b=128))
    ref3 = _reference_forward(x3, params3)
    assert out3.shape == (B3, 3)
    assert jnp.allclose(out3, ref3, atol=2e-3, rtol=2e-3), "mismatch vs reference (out_dim=3, grid)"

    print("KERNEL_OK")
</pallas_src>

<mosaic_0001>
module attributes {stable_mosaic.version = 11 : i64} {
  func.func @_mlp_surv_kernel_lane(%arg0: memref<8x32xf32, #tpu.memory_space<vmem>>, %arg1: memref<32x16xf32, #tpu.memory_space<vmem>>, %arg2: memref<2x16xf32, #tpu.memory_space<vmem>>, %arg3: memref<1x1xf32, #tpu.memory_space<vmem>>, %arg4: memref<1x8xf32, #tpu.memory_space<vmem>>) attributes {dimension_semantics = [], scalar_prefetch = 0 : i64, scratch_operands = 0 : i64, tpu.core_type = #tpu.core_type<tc>} {
    %c0 = arith.constant 0 : index
    %c0_0 = arith.constant 0 : index
    %0 = vector.load %arg0[%c0, %c0_0] : memref<8x32xf32, #tpu.memory_space<vmem>>, vector<8x32xf32>
    %c0_1 = arith.constant 0 : index
    %c0_2 = arith.constant 0 : index
    %1 = vector.load %arg1[%c0_1, %c0_2] : memref<32x16xf32, #tpu.memory_space<vmem>>, vector<32x16xf32>
    %cst = arith.constant dense<0.000000e+00> : vector<8x16xf32>
    %2 = tpu.matmul %0, %1, %cst {dimension_numbers = #tpu.dot_dimension_numbers<[1], [0], [0], [1], [0, 0, 1, 1], [], []>} : vector<8x32xf32>, vector<32x16xf32>, vector<8x16xf32> -> vector<8x16xf32>
    %c0_3 = arith.constant 0 : index
    %c0_4 = arith.constant 0 : index
    %3 = vector.load %arg2[%c0_3, %c0_4] : memref<2x16xf32, #tpu.memory_space<vmem>>, vector<1x16xf32>
    %4 = vector.broadcast %3 : vector<1x16xf32> to vector<8x16xf32>
    %5 = arith.addf %2, %4 : vector<8x16xf32>
    %cst_5 = arith.constant 0.00999999977 : f32
    %6 = vector.broadcast %cst_5 : f32 to vector<8x16xf32>
    %7 = arith.mulf %6, %5 : vector<8x16xf32>
    %8 = arith.maximumf %5, %7 : vector<8x16xf32>
    %c1 = arith.constant 1 : index
    %c0_6 = arith.constant 0 : index
    %9 = vector.load %arg2[%c1, %c0_6] : memref<2x16xf32, #tpu.memory_space<vmem>>, vector<1x16xf32>
    %10 = vector.broadcast %9 : vector<1x16xf32> to vector<8x16xf32>
    %11 = arith.mulf %8, %10 : vector<8x16xf32>
    %cst_7 = arith.constant dense<0.000000e+00> : vector<8xf32>
    %12 = vector.multi_reduction <add>, %11, %cst_7 [1] : vector<8x16xf32> to vector<8xf32>
    %13 = vector.shape_cast %12 : vector<8xf32> to vector<1x8xf32>
    %c0_8 = arith.constant 0 : index
    %c0_9 = arith.constant 0 : index
    %14 = vector.load %arg3[%c0_8, %c0_9] : memref<1x1xf32, #tpu.memory_space<vmem>>, vector<1x1xf32>
    %15 = vector.broadcast %14 : vector<1x1xf32> to vector<1x8xf32>
    %16 = arith.addf %13, %15 : vector<1x8xf32>
    %cst_10 = arith.constant 5.000000e-01 : f32
    %17 = vector.broadcast %cst_10 : f32 to vector<1x8xf32>
    %18 = arith.mulf %17, %16 : vector<1x8xf32>
    %19 = math.tanh %18 : vector<1x8xf32>
    %cst_11 = arith.constant 1.000000e+00 : f32
    %20 = vector.broadcast %cst_11 : f32 to vector<1x8xf32>
    %21 = arith.addf %19, %20 : vector<1x8xf32>
    %cst_12 = arith.constant 5.000000e-01 : f32
    %22 = vector.broadcast %cst_12 : f32 to vector<1x8xf32>
    %23 = arith.mulf %22, %21 : vector<1x8xf32>
    %c0_13 = arith.constant 0 : index
    %c0_14 = arith.constant 0 : index
    %24 = vector.load %arg4[%c0_13, %c0_14] : memref<1x8xf32, #tpu.memory_space<vmem>>, vector<1x8xf32>
    tpu.vector_store %arg4[%c0_13, %c0_14], %23 {strides = array<i32>} : memref<1x8xf32, #tpu.memory_space<vmem>>, vector<1x8xf32>,
    return
  }
}

</mosaic_0001>

<llo_original>
// kernel: tpu_custom_call.1
$region0: #{tpu_custom_call.1}
  #allocation0 [shape = 'u32[]', space=smem, size = 0x4, offset = 0x4, fixed_abs, tag = 'smem constant byte address 0x4 - core index']
  #allocation1 [shape = 'u32[144,128]{1,0:T(1,128)}', space=vmem, size = 0x12000, scoped, tag = 'internal scratch']
  #allocation2 [shape = 'f32[1,1]{1,0:T(1,128)S(1)}', space=vmem, size = 0x200, scoped, tag = 'scoped memory for tpu_custom_call.1']
  %s0 = inlined_call_operand.vmem [shape: f32[8,32], index: 0, kind: input, shape index: {}]
  %s1 = inlined_call_operand.vmem [shape: f32[32,16], index: 1, kind: input, shape index: {}]
  %s2 = inlined_call_operand.vmem [shape: f32[2,16], index: 2, kind: input, shape index: {}]
  %s3 = inlined_call_operand.<no memory space> [shape: f32[1,1], index: 3, kind: input, shape index: {}]
  %s4 = inlined_call_operand.hbm [shape: f32[1,8], index: 4, kind: output, shape index: {}]
  %s5 = sld [smem:[#allocation0]]
  $region26: #{tpu_custom_call.1} parent=0
    _
  %s7 = ssub.s32 1, %s5
  %s8 = scalar_select 0, %s7, %s5
  %v9 = vstv %s3
  %10 = vst [vmem:[#allocation2] sm:$0x1] %v9
  $region1: #{tpu_custom_call.1} parent=0
    #allocation3 [shape = 'u8[512]{0}', space=vmem, size = 0x400, scoped, tag = 'output window, operand 0, single buffered']
    #allocation4 [shape = 's32[1]{0}', space=sflag, size = 0x4, scoped, tag = 'scoped memory for tpu_custom_call.1']
    %11 = vsyncpa [#allocation4], 0
    // Predicated region
    $region2: #{tpu_custom_call.1} parent=1 // pred_check
      _
    $region3: #{tpu_custom_call.1} parent=1 // pred_check_branch
      %13 = sbr.rel (0) target = $region5
    $region4: #{tpu_custom_call.1} parent=1 // pred_region
      _
    $region5: #{tpu_custom_call.1} parent=1 // pred_fallthru
      _
    // Predicated region
    $region6: #{tpu_custom_call.1} parent=1 // pred_check
      _
    $region7: #{tpu_custom_call.1} parent=1 // pred_check_branch
      %15 = sbr.rel (0) target = $region9
    $region8: #{tpu_custom_call.1} parent=1 // pred_region
      _
    $region9: #{tpu_custom_call.1} parent=1 // pred_fallthru
      _
    // Predicated region
    $region10: #{tpu_custom_call.1} parent=1 // pred_check
      _
    $region11: #{tpu_custom_call.1} parent=1 // pred_check_branch
      %17 = sbr.rel (0) target = $region13
    $region12: #{tpu_custom_call.1} parent=1 // pred_region
      _
    $region13: #{tpu_custom_call.1} parent=1 // pred_fallthru
      _
    // Predicated region
    $region14: #{tpu_custom_call.1} parent=1 // pred_check
      _
    $region15: #{tpu_custom_call.1} parent=1 // pred_check_branch
      %19 = sbr.rel (0) target = $region17
    $region16: #{tpu_custom_call.1} parent=1 // pred_region
      _
    $region17: #{tpu_custom_call.1} parent=1 // pred_fallthru
      _
    %v20 = vld [vmem:[%s0] sm:$0xff]
    %v21 = vld [vmem:[%s1] sm:$0xff]
    %v22 = vld [vmem:[%s1 + $0x8] sm:$0xff]
    %v23 = vld [vmem:[%s1 + $0x10] sm:$0xff]
    %v24 = vld [vmem:[%s1 + $0x18] sm:$0xff]
    %v25 = vld [vmem:[%s2] sm:$0x1]
    %v26 = vlaneseq
    %v27 = vshrl.u32 %v26, 7
    %v28 = vsub.s32 0, %v27
    %v29 = vrot.slane %v25, %v28
    %vm30 = vcmask 261120
    %v32 = vsel %vm30, %v20, 0
    %34 = vmatprep.subr.mxu0 0.0
    %35 = vmatpush1.msra.mxu0 %v21
    %36 = vmatprep.subr.mxu0 0.0
    %37 = vmatpush1.msra.mxu0 %v22
    %38 = vmatprep.subr.mxu0 0.0
    %39 = vmatpush1.msra.mxu0 %v23
    %40 = vmatprep.subr.mxu0 0.0
    %41 = vmatpush1.msra.mxu0 %v24
    %42 = vmatprep.subr.mxu0 0.0
    %43 = vmatpush1.msra.mxu0 0.0
    %44 = vmatprep.subr.mxu0 0.0
    %45 = vmatpush1.msra.mxu0 0.0
    %46 = vmatprep.subr.mxu0 0.0
    %47 = vmatpush1.msra.mxu0 0.0
    %48 = vmatprep.subr.mxu0 0.0
    %49 = vmatpush1.msra.mxu0 0.0
    %50 = vmatprep.subr.mxu0 0.0
    %51 = vmatpush1.msra.mxu0 0.0
    %52 = vmatprep.subr.mxu0 0.0
    %53 = vmatpush1.msra.mxu0 0.0
    %54 = vmatprep.subr.mxu0 0.0
    %55 = vmatpush1.msra.mxu0 0.0
    %56 = vmatprep.subr.mxu0 0.0
    %57 = vmatpush1.msra.mxu0 0.0
    %58 = vmatprep.subr.mxu0 0.0
    %59 = vmatpush1.msra.mxu0 0.0
    %60 = vmatprep.subr.mxu0 0.0
    %61 = vmatpush1.msra.mxu0 0.0
    %62 = vmatprep.subr.mxu0 0.0
    %63 = vmatpush1.msra.mxu0 0.0
    %64 = vmatprep.subr.mxu0 0.0
    %65 = vmatpush1.msra.mxu0 0.0
    %66 = vmatprep.subr.mxu0 0.0
    %67 = vmatpush1.msra.mxu0 0.0
    %68 = vmatprep.subr.mxu0 0.0
    %69 = vmatpush1.msra.mxu0 0.0
    %70 = vmatprep.subr.mxu0 0.0
    %71 = vmatpush1.msra.mxu0 0.0
    %72 = vmatprep.subr.mxu0 0.0
    %73 = vmatpush1.msra.mxu0 0.0
    %74 = vmatprep.subr.mxu0 0.0
    %75 = vmatpush1.msra.mxu0 0.0
    %76 = vmatprep.subr.mxu0 0.0
    %77 = vmatpush1.msra.mxu0 0.0
    %78 = vmatprep.subr.mxu0 0.0
    %79 = vmatpush1.msra.mxu0 0.0
    %80 = vmatprep.subr.mxu0 0.0
    %81 = vmatpush1.msra.mxu0 0.0
    %82 = vmatprep.subr.mxu0 0.0
    %83 = vmatpush1.msra.mxu0 0.0
    %84 = vmatprep.subr.mxu0 0.0
    %85 = vmatpush1.msra.mxu0 0.0
    %86 = vmatprep.subr.mxu0 0.0
    %87 = vmatpush1.msra.mxu0 0.0
    %88 = vmatprep.subr.mxu0 0.0
    %89 = vmatpush1.msra.mxu0 0.0
    %90 = vmatprep.subr.mxu0 0.0
    %91 = vmatpush1.msra.mxu0 0.0
    %92 = vmatprep.subr.mxu0 0.0
    %93 = vmatpush1.msra.mxu0 0.0
    %94 = vmatprep.subr.mxu0 0.0
    %95 = vmatpush1.msra.mxu0 0.0
    %96 = vmatprep.subr.mxu0 0.0
    %97 = vmatpush1.msra.mxu0 0.0
    %98 = vmatprep.mubr.f32.mxu0 0.0
    %99 = vmatmul.mubr.f32.gmra.mrb[0].mxu0 %v32
    %v100 = vpop.f32.mrb[0].mxu0
    %v101 = vadd.f32 %v29, %v100
    %v102 = vpop.f32.mrb[0].mxu0
    %103 = vdwg.mxu0
    %v104 = vmul.f32 %v101, 0.01
    %v105 = vmax.f32 %v101, %v104
    %v106 = vld [vmem:[%s2 + $0x1] sm:$0x1]
    %v107 = vlaneseq
    %v108 = vshrl.u32 %v107, 7
    %v109 = vsub.s32 0, %v108
    %v110 = vrot.slane %v106, %v109
    %v111 = vmul.f32 %v105, %v110
    %vm112 = vcmask 130048
    %v113 = vsel %vm112, %v111, 0.0
    %114 = vadd.xlane.f32.xlu0 %v113
    %v115 = vpop.xlane.xlu0 %114
    %v116 = vld [vmem:[#allocation2] sm:$0x1]
    %118 = vset.pattern.permute.xlu0 0
    %119 = vperm.xlu0 %118, %v116
    %v120 = vpop.permute.xlu0 %119
    %v122 = vlaneseq
    %v123 = vshrl.u32 %v122, 7
    %v124 = vsub.s32 0, %v123
    %v125 = vrot.slane %v120, %v124
    %v126 = vadd.f32 %v115, %v125
    %v127 = vmul.f32 %v126, 0.5
    %v128 = vtanh.pop %v127
    %v129 = vadd.f32 %v128, 1.0
    %v130 = vmul.f32 %v129, 0.5
    %v132 = vlaneseq
    %v133 = vand.u32 %v132, 127
    %v134 = vlaneseq
    %v135 = vshrl.u32 %v134, 7
    %v136 = vsub.s32 %v133, %v135
    %v137 = vrot.slane %v130, %v136
    %vm139 = vcmask 57344
    %140 = vst.msk [vmem:[#allocation3] sm:$0x1] %vm139, %v137
    // Predicated region
    $region18: #{tpu_custom_call.1} parent=1 // pred_check
      _
    $region19: #{tpu_custom_call.1} parent=1 // pred_check_branch
      %142 = sbr.rel (0) target = $region21
    $region20: #{tpu_custom_call.1} parent=1 // pred_region
      %s144 = ssub.s32 16, 16
      %145 = vsyncadd [#allocation4], %s144
      %s147 = sshll.u32 [#allocation3], 4
      %s148 = int_to_ptr.vmem [resolvable:$true] %s147
      %150 = dma.vmem_to_hbm [thread:$0]  %s148, 16, %s4, [#allocation4]
    $region21: #{tpu_custom_call.1} parent=1 // pred_fallthru
      _
    // Predicated region
    $region22: #{tpu_custom_call.1} parent=1 // pred_check
      _
    $region23: #{tpu_custom_call.1} parent=1 // pred_check_branch
      %152 = sbr.rel (0) target = $region25
    $region24: #{tpu_custom_call.1} parent=1 // pred_region
      %153 = dma.done [#allocation4], 16
    $region25: #{tpu_custom_call.1} parent=1 // pred_fallthru
      _
    %154 = vsyncpa [#allocation4], 1

</llo_original>
